<compile_context>
chip_gen: v5e
topology: v5e:2x2
jax: 0.10.0
libtpu: 0.0.40
codegen_flags: <defaults>
</compile_context>

<pallas_src>
import functools

import jax
import jax.numpy as jnp
from jax.experimental import pallas as pl
from jax.experimental.pallas import tpu as pltpu


# ---------------------------------------------------------------------------
# Kernels
# ---------------------------------------------------------------------------

def _fused_resident_kernel(x_ref, y_ref, w_ref, b_ref, o_ref, *, compute_dtype):
    """Single-pass kernel: whole transposed weight is VMEM-resident.

    x_ref, y_ref : (tm, d)      activation row tiles
    w_ref        : (d, d)       W^T, DMA'd once (constant index_map)
    b_ref        : (1, d)       bias, DMA'd once
    o_ref        : (tm, d)      output row tile
    """
    z = (x_ref[...] + y_ref[...]).astype(compute_dtype)
    w = w_ref[...].astype(compute_dtype)
    acc = jnp.dot(z, w, preferred_element_type=jnp.float32)
    o_ref[...] = (acc + b_ref[...].astype(jnp.float32)).astype(o_ref.dtype)


def _tiled_kernel(x_ref, y_ref, w_ref, b_ref, o_ref, acc_ref, *, compute_dtype):
    """(M, N, K) tiled kernel for large d.

    x_ref, y_ref : (tm, tk)
    w_ref        : (tk, tn)   transposed weight tile (contraction dim first,
                              canonical MXU layout -> no per-step transpose)
    b_ref        : (1, tn)
    o_ref        : (tm, tn)
    acc_ref      : (tm, tn)   f32 accumulator, resident across the K axis
    """
    k = pl.program_id(2)

    @pl.when(k == 0)
    def _():
        acc_ref[...] = jnp.zeros_like(acc_ref)

    z = (x_ref[...] + y_ref[...]).astype(compute_dtype)
    w = w_ref[...].astype(compute_dtype)
    acc_ref[...] += jnp.dot(z, w, preferred_element_type=jnp.float32)

    @pl.when(k == pl.num_programs(2) - 1)
    def _():
        out = acc_ref[...] + b_ref[...].astype(jnp.float32)
        o_ref[...] = out.astype(o_ref.dtype)


# ---------------------------------------------------------------------------
# Wrapper
# ---------------------------------------------------------------------------

def _round_up(x, m):
    return -(-x // m) * m


def _pick_tile(dim, candidates):
    """Largest candidate that evenly divides dim (dim is pre-padded)."""
    for c in candidates:
        if dim % c == 0:
            return c
    return candidates[-1]


@functools.partial(jax.jit, static_argnames=("d", "data_shape", "compute_dtype"))
def linear_m_loc_forward(x, y, weight, bias, *, d, data_shape, compute_dtype=None):
    """Forward pass of Linear_M_Loc.

    weight: (d_out, d_in) in torch.nn.Linear layout; bias: (d,).
    compute_dtype: optional MXU compute dtype (e.g. jnp.bfloat16 on v6e/v7x);
                   accumulation stays f32.
    """
    out_dtype = x.dtype
    if compute_dtype is None:
        compute_dtype = out_dtype
    itemsize = jnp.dtype(out_dtype).itemsize

    x_flat = x.reshape(-1, d)
    y_flat = y.reshape(-1, d)
    m = x_flat.shape[0]

    # --- lane-align the feature dim (pad to a multiple of 128) -------------
    d_pad = _round_up(d, 128)
    wt = weight.T                      # (d_in, d_out): contraction dim first
    b2d = bias.reshape(1, d)
    if d_pad != d:
        pad_c = d_pad - d
        x_flat = jnp.pad(x_flat, ((0, 0), (0, pad_c)))
        y_flat = jnp.pad(y_flat, ((0, 0), (0, pad_c)))
        wt = jnp.pad(wt, ((0, pad_c), (0, pad_c)))
        b2d = jnp.pad(b2d, ((0, 0), (0, pad_c)))

    # --- row tile: up to 512, sublane-aligned; pad rows instead of falling
    #     back to a full-extent (VMEM-blowing / masked-store) block ----------
    row_cap = _round_up(m, 8)
    tm = 512 if row_cap >= 512 else row_cap
    m_pad = _round_up(m, tm)
    if m_pad != m:
        pad_r = m_pad - m
        x_flat = jnp.pad(x_flat, ((0, pad_r), (0, 0)))
        y_flat = jnp.pad(y_flat, ((0, pad_r), (0, 0)))

    # --- choose the execution path based on the VMEM footprint -------------
    weight_vmem = 2 * d_pad * d_pad * itemsize                 # double-buffered
    resident_act_vmem = 2 * 3 * tm * d_pad * itemsize          # x, y, out (2 bufs)
    resident_needed = weight_vmem + resident_act_vmem + (1 << 20)
    use_resident = resident_needed <= (40 << 20)

    if use_resident:
        grid = (m_pad // tm,)
        cost = pl.CostEstimate(
            flops=2 * m_pad * d_pad * d_pad + m_pad * d_pad,
            transcendentals=0,
            bytes_accessed=itemsize
            * (3 * m_pad * d_pad + d_pad * d_pad + d_pad),
        )
        vmem_limit = int(min(max(resident_needed + (4 << 20), 32 << 20), 48 << 20))
        out_flat = pl.pallas_call(
            functools.partial(_fused_resident_kernel, compute_dtype=compute_dtype),
            out_shape=jax.ShapeDtypeStruct((m_pad, d_pad), out_dtype),
            grid_spec=pltpu.PrefetchScalarGridSpec(
                num_scalar_prefetch=0,
                grid=grid,
                in_specs=[
                    pl.BlockSpec((tm, d_pad), lambda i: (i, 0)),       # x rows
                    pl.BlockSpec((tm, d_pad), lambda i: (i, 0)),       # y rows
                    pl.BlockSpec((d_pad, d_pad), lambda i: (0, 0)),    # W^T (resident)
                    pl.BlockSpec((1, d_pad), lambda i: (0, 0)),        # bias (resident)
                ],
                out_specs=pl.BlockSpec((tm, d_pad), lambda i: (i, 0)),
            ),
            compiler_params=pltpu.CompilerParams(
                dimension_semantics=("parallel",),
                vmem_limit_bytes=vmem_limit,
            ),
            cost_estimate=cost,
        )(x_flat, y_flat, wt, b2d)
    else:
        tn = _pick_tile(d_pad, (512, 256, 128))
        tk = _pick_tile(d_pad, (512, 256, 128))
        m_tiles = m_pad // tm
        n_tiles = d_pad // tn
        k_tiles = d_pad // tk
        grid = (m_tiles, n_tiles, k_tiles)
        tiled_needed = (
            2 * (2 * tm * tk + tk * tn + tm * tn) * itemsize
            + tm * tn * 4
            + (1 << 20)
        )
        vmem_limit = int(min(max(tiled_needed + (4 << 20), 32 << 20), 48 << 20))
        cost = pl.CostEstimate(
            flops=2 * m_pad * d_pad * d_pad + m_pad * d_pad * n_tiles,
            transcendentals=0,
            bytes_accessed=itemsize
            * (
                2 * m_pad * d_pad * n_tiles        # x, y re-read once per N tile
                + d_pad * d_pad * m_tiles          # weight re-streamed per M tile
                + m_pad * d_pad                    # output write
                + d_pad
            ),
        )
        out_flat = pl.pallas_call(
            functools.partial(_tiled_kernel, compute_dtype=compute_dtype),
            out_shape=jax.ShapeDtypeStruct((m_pad, d_pad), out_dtype),
            grid_spec=pltpu.PrefetchScalarGridSpec(
                num_scalar_prefetch=0,
                grid=grid,
                in_specs=[
                    pl.BlockSpec((tm, tk), lambda i, j, k: (i, k)),    # x
                    pl.BlockSpec((tm, tk), lambda i, j, k: (i, k)),    # y
                    pl.BlockSpec((tk, tn), lambda i, j, k: (k, j)),    # W^T tile
                    pl.BlockSpec((1, tn), lambda i, j, k: (0, j)),     # bias
                ],
                out_specs=pl.BlockSpec((tm, tn), lambda i, j, k: (i, j)),
                scratch_shapes=[pltpu.VMEM((tm, tn), jnp.float32)],
            ),
            compiler_params=pltpu.CompilerParams(
                dimension_semantics=("parallel", "parallel", "arbitrary"),
                vmem_limit_bytes=vmem_limit,
            ),
            cost_estimate=cost,
        )(x_flat, y_flat, wt, b2d)

    # Drop padding, then nn.Unflatten(1, data_shape[1:]).
    out = out_flat[:m, :d]
    return out.reshape((-1,) + tuple(data_shape[1:]))


if __name__ == "__main__":
    # data_shape = (B, C, H, W); d must equal C*H*W so Unflatten is valid.
    B, C, H, W = 2, 8, 4, 4
    data_shape = (B, C, H, W)
    d = C * H * W  # 128

    key = jax.random.PRNGKey(0)
    kx, ky, kw, kb = jax.random.split(key, 4)

    x = jax.random.normal(kx, data_shape, dtype=jnp.float32)
    y = jax.random.normal(ky, data_shape, dtype=jnp.float32)

    # nn.Linear-style init: U(-1/sqrt(d), 1/sqrt(d)).
    bound = 1.0 / float(d) ** 0.5
    weight = jax.random.uniform(kw, (d, d), jnp.float32, -bound, bound)
    bias = jax.random.uniform(kb, (d,), jnp.float32, -bound, bound)

    out = linear_m_loc_forward(x, y, weight, bias, d=d, data_shape=data_shape)
    out = jax.block_until_ready(out)

    # Reference check in plain JAX.
    z_flat = (x + y).reshape(-1, d)
    ref = (z_flat @ weight.T + bias).reshape((-1,) + data_shape[1:])
    assert out.shape == (B, C, H, W), out.shape
    assert jnp.allclose(out, ref, atol=1e-4, rtol=1e-4), float(
        jnp.max(jnp.abs(out - ref))
    )

    print("KERNEL_OK")
</pallas_src>

<mosaic_0001>
module attributes {stable_mosaic.version = 11 : i64} {
  func.func @_fused_resident_kernel(%arg0: i32, %arg1: memref<8x128xf32, #tpu.memory_space<vmem>>, %arg2: memref<8x128xf32, #tpu.memory_space<vmem>>, %arg3: memref<128x128xf32, #tpu.memory_space<vmem>>, %arg4: memref<1x128xf32, #tpu.memory_space<vmem>>, %arg5: memref<8x128xf32, #tpu.memory_space<vmem>>) attributes {dimension_semantics = [#tpu.dimension_semantics<parallel>], iteration_bounds = array<i64: 1>, scalar_prefetch = 0 : i64, scratch_operands = 0 : i64, tpu.core_type = #tpu.core_type<tc>, window_params = [{transform_indices = @transform_0, window_bounds = array<i64: 8, 128>}, {transform_indices = @transform_1, window_bounds = array<i64: 8, 128>}, {pipeline_mode = #tpu.pipeline_mode<synchronous>, transform_indices = @transform_2, window_bounds = array<i64: 128, 128>}, {pipeline_mode = #tpu.pipeline_mode<synchronous>, transform_indices = @transform_3, window_bounds = array<i64: 1, 128>}, {transform_indices = @transform_4, window_bounds = array<i64: 8, 128>}]} {
    %c0 = arith.constant 0 : index
    %c0_0 = arith.constant 0 : index
    %0 = vector.load %arg1[%c0, %c0_0] : memref<8x128xf32, #tpu.memory_space<vmem>>, vector<8x128xf32>
    %c0_1 = arith.constant 0 : index
    %c0_2 = arith.constant 0 : index
    %1 = vector.load %arg2[%c0_1, %c0_2] : memref<8x128xf32, #tpu.memory_space<vmem>>, vector<8x128xf32>
    %2 = arith.addf %0, %1 : vector<8x128xf32>
    %c0_3 = arith.constant 0 : index
    %c0_4 = arith.constant 0 : index
    %3 = vector.load %arg3[%c0_3, %c0_4] : memref<128x128xf32, #tpu.memory_space<vmem>>, vector<128x128xf32>
    %cst = arith.constant dense<0.000000e+00> : vector<8x128xf32>
    %4 = tpu.matmul %2, %3, %cst {dimension_numbers = #tpu.dot_dimension_numbers<[1], [0], [0], [1], [0, 0, 1, 1], [], []>} : vector<8x128xf32>, vector<128x128xf32>, vector<8x128xf32> -> vector<8x128xf32>
    %c0_5 = arith.constant 0 : index
    %c0_6 = arith.constant 0 : index
    %5 = vector.load %arg4[%c0_5, %c0_6] : memref<1x128xf32, #tpu.memory_space<vmem>>, vector<1x128xf32>
    %6 = vector.broadcast %5 : vector<1x128xf32> to vector<8x128xf32>
    %7 = arith.addf %4, %6 : vector<8x128xf32>
    %c0_7 = arith.constant 0 : index
    %c0_8 = arith.constant 0 : index
    %8 = vector.load %arg5[%c0_7, %c0_8] : memref<8x128xf32, #tpu.memory_space<vmem>>, vector<8x128xf32>
    tpu.vector_store %arg5[%c0_7, %c0_8], %7 {strides = array<i32>} : memref<8x128xf32, #tpu.memory_space<vmem>>, vector<8x128xf32>,
    return
  }
  func.func @transform_0(%arg0: i32) -> (i32, i32) {
    %c0_i32 = arith.constant 0 : i32
    %c0_i32_0 = arith.constant 0 : i32
    return %arg0, %c0_i32 : i32, i32
  }
  func.func @transform_1(%arg0: i32) -> (i32, i32) {
    %c0_i32 = arith.constant 0 : i32
    %c0_i32_0 = arith.constant 0 : i32
    return %arg0, %c0_i32 : i32, i32
  }
  func.func @transform_2(%arg0: i32) -> (i32, i32) {
    %c0_i32 = arith.constant 0 : i32
    %c0_i32_0 = arith.constant 0 : i32
    %c0_i32_1 = arith.constant 0 : i32
    return %c0_i32, %c0_i32_0 : i32, i32
  }
  func.func @transform_3(%arg0: i32) -> (i32, i32) {
    %c0_i32 = arith.constant 0 : i32
    %c0_i32_0 = arith.constant 0 : i32
    %c0_i32_1 = arith.constant 0 : i32
    return %c0_i32, %c0_i32_0 : i32, i32
  }
  func.func @transform_4(%arg0: i32) -> (i32, i32) {
    %c0_i32 = arith.constant 0 : i32
    %c0_i32_0 = arith.constant 0 : i32
    return %arg0, %c0_i32 : i32, i32
  }
}

</mosaic_0001>

<llo_original>
// kernel: linear_m_loc_forward.1
$region0: #{linear_m_loc_forward.1}
  #allocation0 [shape = 'u32[]', space=smem, size = 0x4, offset = 0x4, fixed_abs, tag = 'smem constant byte address 0x4 - core index']
  #allocation1 [shape = 'u32[72,128]{1,0:T(1,128)}', space=vmem, size = 0x9000, scoped, tag = 'internal scratch']
  %s0 = inlined_call_operand.vmem [shape: f32[8,128], index: 0, kind: input, shape index: {}]
  %s1 = inlined_call_operand.vmem [shape: f32[8,128], index: 1, kind: input, shape index: {}]
  %s2 = inlined_call_operand.vmem [shape: f32[128,128], index: 2, kind: input, shape index: {}]
  %s3 = inlined_call_operand.vmem [shape: f32[1,128], index: 3, kind: input, shape index: {}]
  %s4 = inlined_call_operand.vmem [shape: f32[8,128], index: 4, kind: output, shape index: {}]
  %s5 = sld [smem:[#allocation0]]
  $region26: #{linear_m_loc_forward.1} parent=0
    _
  %s7 = ssub.s32 1, %s5
  %s8 = scalar_select 0, %s7, %s5
  // Predicated region
  $region2: #{linear_m_loc_forward.1} parent=0 // pred_check
    _
  $region3: #{linear_m_loc_forward.1} parent=0 // pred_check_branch
    %10 = sbr.rel (0) target = $region5
  $region4: #{linear_m_loc_forward.1} parent=0 // pred_region
    _
  $region5: #{linear_m_loc_forward.1} parent=0 // pred_fallthru
    _
  // Predicated region
  $region6: #{linear_m_loc_forward.1} parent=0 // pred_check
    _
  $region7: #{linear_m_loc_forward.1} parent=0 // pred_check_branch
    %12 = sbr.rel (0) target = $region9
  $region8: #{linear_m_loc_forward.1} parent=0 // pred_region
    _
  $region9: #{linear_m_loc_forward.1} parent=0 // pred_fallthru
    _
  // Predicated region
  $region10: #{linear_m_loc_forward.1} parent=0 // pred_check
    _
  $region11: #{linear_m_loc_forward.1} parent=0 // pred_check_branch
    %14 = sbr.rel (0) target = $region13
  $region12: #{linear_m_loc_forward.1} parent=0 // pred_region
    _
  $region13: #{linear_m_loc_forward.1} parent=0 // pred_fallthru
    _
  // Predicated region
  $region14: #{linear_m_loc_forward.1} parent=0 // pred_check
    _
  $region15: #{linear_m_loc_forward.1} parent=0 // pred_check_branch
    %16 = sbr.rel (0) target = $region17
  $region16: #{linear_m_loc_forward.1} parent=0 // pred_region
    _
  $region17: #{linear_m_loc_forward.1} parent=0 // pred_fallthru
    _
  %v17 = vld [vmem:[%s0] sm:$0xff]
  %v18 = vld [vmem:[%s1] sm:$0xff]
  %v19 = vadd.f32 %v17, %v18
  %v20 = vld [vmem:[%s2] sm:$0xff]
  %v21 = vld [vmem:[%s2 + $0x8] sm:$0xff]
  %v22 = vld [vmem:[%s2 + $0x10] sm:$0xff]
  %v23 = vld [vmem:[%s2 + $0x18] sm:$0xff]
  %v24 = vld [vmem:[%s2 + $0x20] sm:$0xff]
  %v25 = vld [vmem:[%s2 + $0x28] sm:$0xff]
  %v26 = vld [vmem:[%s2 + $0x30] sm:$0xff]
  %v27 = vld [vmem:[%s2 + $0x38] sm:$0xff]
  %v28 = vld [vmem:[%s2 + $0x40] sm:$0xff]
  %v29 = vld [vmem:[%s2 + $0x48] sm:$0xff]
  %v30 = vld [vmem:[%s2 + $0x50] sm:$0xff]
  %v31 = vld [vmem:[%s2 + $0x58] sm:$0xff]
  %v32 = vld [vmem:[%s2 + $0x60] sm:$0xff]
  %v33 = vld [vmem:[%s2 + $0x68] sm:$0xff]
  %v34 = vld [vmem:[%s2 + $0x70] sm:$0xff]
  %v35 = vld [vmem:[%s2 + $0x78] sm:$0xff]
  %v36 = vld [vmem:[%s3] sm:$0x1]
  %v38 = vperm.slane %v36, 0
  %40 = vmatpush.msra.mxu0 %v35
  %41 = vmatpush.msra.mxu0 %v34
  %42 = vmatpush.msra.mxu0 %v33
  %43 = vmatpush.msra.mxu0 %v32
  %44 = vmatpush.msra.mxu0 %v31
  %45 = vmatpush.msra.mxu0 %v30
  %46 = vmatpush.msra.mxu0 %v29
  %47 = vmatpush.msra.mxu0 %v28
  %48 = vmatpush.msra.mxu0 %v27
  %49 = vmatpush.msra.mxu0 %v26
  %50 = vmatpush.msra.mxu0 %v25
  %51 = vmatpush.msra.mxu0 %v24
  %52 = vmatpush.msra.mxu0 %v23
  %53 = vmatpush.msra.mxu0 %v22
  %54 = vmatpush.msra.mxu0 %v21
  %55 = vmatpush.msra.mxu0 %v20
  %56 = vmatmul.f32.gmra.mxu0 %v19
  %v57 = vpop.f32.mrf.mxu0
  %v58 = vadd.f32 %v38, %v57
  %59 = vdwg.mxu0
  %60 = vst [vmem:[%s4] sm:$0xff] %v58
  // Predicated region
  $region18: #{linear_m_loc_forward.1} parent=0 // pred_check
    _
  $region19: #{linear_m_loc_forward.1} parent=0 // pred_check_branch
    %62 = sbr.rel (0) target = $region21
  $region20: #{linear_m_loc_forward.1} parent=0 // pred_region
    _
  $region21: #{linear_m_loc_forward.1} parent=0 // pred_fallthru
    _
  // Predicated region
  $region22: #{linear_m_loc_forward.1} parent=0 // pred_check
    _
  $region23: #{linear_m_loc_forward.1} parent=0 // pred_check_branch
    %64 = sbr.rel (0) target = $region25
  $region24: #{linear_m_loc_forward.1} parent=0 // pred_region
    _
  $region25: #{linear_m_loc_forward.1} parent=0 // pred_fallthru
    _

</llo_original>
